<compile_context>
chip_gen: v7x
topology: tpu7x:2x2x1
jax: 0.10.0
libtpu: 0.0.40
codegen_flags: <defaults>
</compile_context>

<pallas_src>
import functools

import jax
import jax.numpy as jnp
from jax.experimental import pallas as pl
from jax.experimental.pallas import tpu as pltpu

LANES = 128
SUBLANES = 8
DEFAULT_BLOCK_ELEMS = 512 * 1024          # ~2 MiB per f32 input block
PALLAS_MIN_FEATURES = SUBLANES * LANES    # need >= one dense (8,128) slab per batch
_VMEM_LIMIT = 32 * 1024 * 1024            # safe on v5e/v6e/v7x; blocks use far less


def _round_up(x, m):
    return ((x + m - 1) // m) * m


# ---------------------------------------------------------------------------
# Kernel 1: per-batch mean of |g| over the (R, 128) feature slab.
#   grid = (nsplit, ksub); each split accumulates a partial sum into its own
#   output row; the k axis is the (arbitrary) reduction axis.
# ---------------------------------------------------------------------------
def _mean_abs_kernel(x_ref, out_ref, acc_ref, *, ksub, rows_per_block,
                     rows_valid, inv_n, mask):
    k = pl.program_id(1)

    @pl.when(k == 0)
    def _():
        acc_ref[...] = jnp.zeros_like(acc_ref)

    x = jnp.abs(x_ref[...].astype(jnp.float32))          # (B, TR, 128)
    if mask:
        # Logical block index (pre-clamp) -> zero out rows past the real array.
        j = pl.program_id(0) * ksub + k
        rows = jax.lax.broadcasted_iota(jnp.int32, x.shape, 1) + j * rows_per_block
        x = jnp.where(rows < rows_valid, x, 0.0)
    acc_ref[...] += jnp.sum(x, axis=1)                    # (B, 128)

    @pl.when(k == pl.num_programs(1) - 1)
    def _():
        # Fold the 1/N of the mean into the finalize step.
        out_ref[...] = (jnp.sum(acc_ref[...], axis=1, keepdims=True) * inv_n)[None]


def mean_abs_per_batch(x3, n_true, rows_valid, rows_per_block, num_blocks):
    """x3: (B, R, 128) padded view of a leaf. Returns (B,) = mean(|g|) over N."""
    B = x3.shape[0]
    nsplit = 2 if num_blocks >= 2 else 1            # lets v7x use both TensorCores
    ksub = -(-num_blocks // nsplit)
    mask = (nsplit * ksub * rows_per_block) != rows_valid
    kmax = num_blocks - 1

    kern = functools.partial(
        _mean_abs_kernel, ksub=ksub, rows_per_block=rows_per_block,
        rows_valid=rows_valid, inv_n=1.0 / float(n_true), mask=mask)

    sums = pl.pallas_call(
        kern,
        out_shape=jax.ShapeDtypeStruct((nsplit, B, 1), jnp.float32),
        grid_spec=pltpu.PrefetchScalarGridSpec(
            num_scalar_prefetch=0,
            grid=(nsplit, ksub),
            in_specs=[pl.BlockSpec(
                (B, rows_per_block, LANES),
                # Clamp keeps the DMA in-bounds for the (rare) odd-K tail block;
                # the in-kernel row mask zeroes its contribution.
                lambda s, k: (0, jnp.minimum(s * ksub + k, kmax), 0))],
            out_specs=pl.BlockSpec((1, B, 1), lambda s, k: (s, 0, 0)),
            scratch_shapes=[pltpu.VMEM((B, LANES), jnp.float32)],
        ),
        compiler_params=pltpu.CompilerParams(
            dimension_semantics=("parallel", "arbitrary"),
            vmem_limit_bytes=_VMEM_LIMIT),
    )(x3)
    return jnp.sum(sums[:, :, 0], axis=0)           # combine per-split partials -> (B,)


# ---------------------------------------------------------------------------
# Kernel 2: per-batch rescale then symmetric clip (pure streaming, lane dense).
# ---------------------------------------------------------------------------
def _rescale_clip_kernel(x_ref, rf_ref, o_ref, *, clip):
    y = x_ref[...].astype(jnp.float32) * rf_ref[...]     # (B,1,1) broadcasts
    o_ref[...] = jnp.clip(y, -clip, clip).astype(o_ref.dtype)


def rescale_and_clip(x3, rf, clip, rows_per_block):
    """x3: (B, R, 128), rf: (B,) -> clipped rescaled (B, R, 128) in x3.dtype."""
    B, R, _ = x3.shape
    K = -(-R // rows_per_block)
    rf3 = rf.reshape(B, 1, 1).astype(jnp.float32)
    return pl.pallas_call(
        functools.partial(_rescale_clip_kernel, clip=float(clip)),
        out_shape=jax.ShapeDtypeStruct(x3.shape, x3.dtype),
        grid_spec=pltpu.PrefetchScalarGridSpec(
            num_scalar_prefetch=0,
            grid=(K,),
            in_specs=[
                pl.BlockSpec((B, rows_per_block, LANES), lambda k: (0, k, 0)),
                pl.BlockSpec((B, 1, 1), lambda k: (0, 0, 0)),
            ],
            out_specs=pl.BlockSpec((B, rows_per_block, LANES), lambda k: (0, k, 0)),
        ),
        compiler_params=pltpu.CompilerParams(
            dimension_semantics=("parallel",),
            vmem_limit_bytes=_VMEM_LIMIT),
    )(x3, rf3)


# ---------------------------------------------------------------------------
# Leaf preparation: flatten, pad once to a 128 multiple, view as (B, R, 128),
# and pick a sublane-dense block size from the byte budget.
# ---------------------------------------------------------------------------
def _prep_leaf(g, block_elems):
    B = g.shape[0]
    g2 = g.reshape(B, -1)
    N = g2.shape[1]
    Np = _round_up(N, LANES)
    if Np != N:
        g2 = jnp.pad(g2, ((0, 0), (0, Np - N)))          # single pad, reused by both phases
    R = Np // LANES
    tr_target = max(SUBLANES, (block_elems // (B * LANES)) // SUBLANES * SUBLANES)
    TR = R if R <= tr_target else tr_target              # TR == R or multiple of 8
    K = -(-R // TR)
    x3 = g2.reshape(B, R, LANES)                         # row-major -> no data movement
    return x3, N, R, TR, K


# ---------------------------------------------------------------------------
# Module wrapper (stateless — the PyTorch module has no learned parameters).
# ---------------------------------------------------------------------------
class AutorescaleGradientControl:
    def __init__(self, rescale_threshold=1.0, rescale_reduction_mode="mean",
                 clip_factor=100.0, num_batch_dims=1,
                 block_target_elems=DEFAULT_BLOCK_ELEMS):
        assert num_batch_dims == 1, "kernel implements num_batch_dims=1"
        # TODO(synk): only the default 'mean' reduction is implemented in-kernel;
        # 'max'/'sum'/'quartiles_mean' variants are not wired up.
        assert rescale_reduction_mode == "mean"
        self.rescale_threshold = float(rescale_threshold)
        self.clip_threshold = float(clip_factor) * float(rescale_threshold)
        self.block_target_elems = int(block_target_elems)

    def __call__(self, gradient_tree):
        leaves, treedef = jax.tree_util.tree_flatten(gradient_tree)

        # ---- Phase 1: per-leaf, per-batch mean(|g|) ----
        prepped, summaries = [], []
        for g in leaves:
            B = g.shape[0]
            n_feat = 1
            for d in g.shape[1:]:
                n_feat *= d
            if n_feat >= PALLAS_MIN_FEATURES:
                x3, N, R, TR, K = _prep_leaf(g, self.block_target_elems)
                prepped.append(("pallas", x3, N, R, TR))
                summaries.append(mean_abs_per_batch(x3, N, R, TR, K))
            else:
                # Tiny leaf: a pallas_call would be pure launch overhead.
                g2 = g.reshape(B, -1)
                prepped.append(("jax", g2, n_feat, None, None))
                summaries.append(jnp.mean(jnp.abs(g2.astype(jnp.float32)), axis=-1))

        # ---- Phase 2: combine across leaves (tiny (B, num_leaves) glue) ----
        observed = jnp.max(jnp.stack(summaries, axis=-1), axis=-1)       # (B,)
        rf = jnp.where(observed > self.rescale_threshold,
                       self.rescale_threshold / observed,
                       jnp.float32(1.0)).astype(jnp.float32)             # (B,)

        # ---- Phase 3: per-leaf rescale + clip ----
        out_leaves = []
        for g, info in zip(leaves, prepped):
            B = g.shape[0]
            if info[0] == "pallas":
                _, x3, N, R, TR = info
                o3 = rescale_and_clip(x3, rf, self.clip_threshold, TR)
                o2 = o3.reshape(B, R * LANES)
                if R * LANES != N:
                    o2 = o2[:, :N]                       # single trailing slice
                out_leaves.append(o2.reshape(g.shape))
            else:
                _, g2, n_feat, _, _ = info
                y = jnp.clip(g2.astype(jnp.float32) * rf[:, None],
                             -self.clip_threshold, self.clip_threshold)
                out_leaves.append(y.reshape(g.shape).astype(g.dtype))
        return jax.tree_util.tree_unflatten(treedef, out_leaves)


# ---------------------------------------------------------------------------
# Pure-JAX reference for validation.
# ---------------------------------------------------------------------------
def _reference(gradient_tree, rescale_threshold=1.0, clip_factor=100.0):
    leaves, treedef = jax.tree_util.tree_flatten(gradient_tree)
    summaries = [jnp.mean(jnp.abs(g.reshape(g.shape[0], -1)), axis=-1)
                 for g in leaves]
    observed = jnp.max(jnp.stack(summaries, axis=-1), axis=-1)
    rf = jnp.where(observed > rescale_threshold,
                   rescale_threshold / observed, 1.0)
    clip = clip_factor * rescale_threshold
    outs = []
    for g in leaves:
        shape = (g.shape[0],) + (1,) * (g.ndim - 1)
        outs.append(jnp.clip(rf.reshape(shape) * g, -clip, clip))
    return jax.tree_util.tree_unflatten(treedef, outs)


if __name__ == "__main__":
    key = jax.random.PRNGKey(0)
    k1, k2, k3, k4, k5 = jax.random.split(key, 5)

    B = 2
    grad_tree = {
        # conv-style gradient (NCHW), scaled up so rescaling triggers  (Pallas, N=1024)
        "conv_w": 5.0 * jax.random.normal(k1, (B, 4, 16, 16), jnp.float32),
        # wider conv-style gradient                                    (Pallas, N=3072)
        "mid_w": 3.0 * jax.random.normal(k2, (B, 4, 24, 32), jnp.float32),
        # ragged feature count -> exercises the pad/slice path          (Pallas, N=1080)
        "proj": 2.0 * jax.random.normal(k3, (B, 9, 120), jnp.float32),
        # attention-style gradient                                      (JAX path)
        "attn": jax.random.normal(k4, (B, 8, 32), jnp.float32),
        # dense gradient                                                (JAX path)
        "dense": 0.1 * jax.random.normal(k5, (B, 32), jnp.float32),
    }

    ref = _reference(grad_tree)

    # Default (large-block) configuration.
    ctrl = AutorescaleGradientControl(rescale_threshold=1.0,
                                      rescale_reduction_mode="mean",
                                      clip_factor=100.0,
                                      num_batch_dims=1)
    out = jax.block_until_ready(ctrl(grad_tree))
    for name in ref:
        assert jnp.allclose(out[name], ref[name], atol=1e-5, rtol=1e-5), name

    # Tiny-block configuration: exercises multi-block accumulation, tail-row
    # masking, the clamped odd-K tail, and the 2-way parallel reduction split
    # at these small demo shapes.
    ctrl_small = AutorescaleGradientControl(block_target_elems=2048)
    out2 = jax.block_until_ready(ctrl_small(grad_tree))
    for name in ref:
        assert jnp.allclose(out2[name], ref[name], atol=1e-5, rtol=1e-5), name

    print("KERNEL_OK")
</pallas_src>

<mosaic_0001>
module attributes {stable_mosaic.version = 11 : i64} {
  func.func @_mean_abs_kernel(%arg0: i32, %arg1: i32, %arg2: memref<2x8x128xf32, #tpu.memory_space<vmem>>, %arg3: memref<1x2x1xf32, #tpu.memory_space<vmem>>, %arg4: memref<2x128xf32, #tpu.memory_space<vmem>>) attributes {dimension_semantics = [#tpu.dimension_semantics<parallel>, #tpu.dimension_semantics<arbitrary>], iteration_bounds = array<i64: 1, 1>, scalar_prefetch = 0 : i64, scratch_operands = 1 : i64, tpu.core_type = #tpu.core_type<tc>, window_params = [{transform_indices = @transform_0, window_bounds = array<i64: 2, 8, 128>}, {transform_indices = @transform_1, window_bounds = array<i64: 1, 2, 1>}]} {
    %c0_i32 = arith.constant 0 : i32
    %0 = arith.cmpi eq, %arg1, %c0_i32 : i32
    %1 = arith.extui %0 : i1 to i32
    %c0_i32_0 = arith.constant 0 : i32
    %2 = arith.cmpi ne, %1, %c0_i32_0 : i32
    scf.if %2 {
      %cst_9 = arith.constant 0.000000e+00 : f32
      %12 = vector.broadcast %cst_9 : f32 to vector<2x128xf32>
      %c0_10 = arith.constant 0 : index
      %c0_11 = arith.constant 0 : index
      %13 = vector.load %arg4[%c0_10, %c0_11] : memref<2x128xf32, #tpu.memory_space<vmem>>, vector<2x128xf32>
      tpu.vector_store %arg4[%c0_10, %c0_11], %12 {strides = array<i32>} : memref<2x128xf32, #tpu.memory_space<vmem>>, vector<2x128xf32>,
    } else {
    }
    %c0 = arith.constant 0 : index
    %c0_1 = arith.constant 0 : index
    %c0_2 = arith.constant 0 : index
    %3 = vector.load %arg2[%c0, %c0_1, %c0_2] : memref<2x8x128xf32, #tpu.memory_space<vmem>>, vector<2x8x128xf32>
    %4 = math.absf %3 : vector<2x8x128xf32>
    %c0_3 = arith.constant 0 : index
    %c0_4 = arith.constant 0 : index
    %5 = vector.load %arg4[%c0_3, %c0_4] : memref<2x128xf32, #tpu.memory_space<vmem>>, vector<2x128xf32>
    %cst = arith.constant dense<0.000000e+00> : vector<2x128xf32>
    %6 = vector.multi_reduction <add>, %4, %cst [1] : vector<2x8x128xf32> to vector<2x128xf32>
    %7 = arith.addf %5, %6 : vector<2x128xf32>
    %c0_5 = arith.constant 0 : index
    %c0_6 = arith.constant 0 : index
    %8 = vector.load %arg4[%c0_5, %c0_6] : memref<2x128xf32, #tpu.memory_space<vmem>>, vector<2x128xf32>
    tpu.vector_store %arg4[%c0_5, %c0_6], %7 {strides = array<i32>} : memref<2x128xf32, #tpu.memory_space<vmem>>, vector<2x128xf32>,
    %c0_i32_7 = arith.constant 0 : i32
    %9 = arith.cmpi eq, %arg1, %c0_i32_7 : i32
    %10 = arith.extui %9 : i1 to i32
    %c0_i32_8 = arith.constant 0 : i32
    %11 = arith.cmpi ne, %10, %c0_i32_8 : i32
    scf.if %11 {
      %c0_9 = arith.constant 0 : index
      %c0_10 = arith.constant 0 : index
      %12 = vector.load %arg4[%c0_9, %c0_10] : memref<2x128xf32, #tpu.memory_space<vmem>>, vector<2x128xf32>
      %cst_11 = arith.constant dense<0.000000e+00> : vector<2xf32>
      %13 = vector.multi_reduction <add>, %12, %cst_11 [1] : vector<2x128xf32> to vector<2xf32>
      %14 = vector.shape_cast %13 : vector<2xf32> to vector<2x1xf32>
      %cst_12 = arith.constant 9.765625E-4 : f32
      %15 = vector.broadcast %cst_12 : f32 to vector<2x1xf32>
      %16 = arith.mulf %14, %15 : vector<2x1xf32>
      %17 = vector.shape_cast %16 : vector<2x1xf32> to vector<1x2x1xf32>
      %c0_13 = arith.constant 0 : index
      %c0_14 = arith.constant 0 : index
      %c0_15 = arith.constant 0 : index
      %18 = vector.load %arg3[%c0_13, %c0_14, %c0_15] : memref<1x2x1xf32, #tpu.memory_space<vmem>>, vector<1x2x1xf32>
      tpu.vector_store %arg3[%c0_13, %c0_14, %c0_15], %17 {strides = array<i32>} : memref<1x2x1xf32, #tpu.memory_space<vmem>>, vector<1x2x1xf32>,
    } else {
    }
    return
  }
  func.func @transform_0(%arg0: i32, %arg1: i32) -> (i32, i32, i32) {
    %c1_i32 = arith.constant 1 : i32
    %0 = arith.muli %arg0, %c1_i32 : i32
    %1 = arith.addi %0, %arg1 : i32
    %c0_i32 = arith.constant 0 : i32
    %2 = arith.minsi %1, %c0_i32 : i32
    %c0_i32_0 = arith.constant 0 : i32
    %c0_i32_1 = arith.constant 0 : i32
    %c0_i32_2 = arith.constant 0 : i32
    return %c0_i32_0, %2, %c0_i32_1 : i32, i32, i32
  }
  func.func @transform_1(%arg0: i32, %arg1: i32) -> (i32, i32, i32) {
    %c0_i32 = arith.constant 0 : i32
    %c0_i32_0 = arith.constant 0 : i32
    %c0_i32_1 = arith.constant 0 : i32
    return %arg0, %c0_i32, %c0_i32_0 : i32, i32, i32
  }
}

</mosaic_0001>

<llo_original>
// kernel: tpu_custom_call.1
$region0: #{tpu_custom_call.1}
  #allocation0 [shape = 'u32[]', space=smem, size = 0x4, offset = 0x4, fixed_abs, tag = 'smem constant byte address 0x4 - core index']
  #allocation1 [shape = 'u32[144,128]{1,0:T(1,128)}', space=vmem, size = 0x12000, scoped, tag = 'internal scratch']
  #allocation2 [shape = 'f32[2,128]{1,0:T(2,128)}', space=vmem, size = 0x400, scoped, tag = 'scratch operand']
  %s0 = inlined_call_operand.hbm [shape: f32[2,8,128], index: 0, kind: input, shape index: {}]
  %s1 = inlined_call_operand.vmem [shape: f32[1,2,1], index: 1, kind: output, shape index: {}]
  %s2 = sld [smem:[#allocation0]]
  $region26: #{tpu_custom_call.1} parent=0
    _
  %s4 = ssub.s32 1, %s2
  %s5 = scalar_select 0, %s4, %s2
  $region1: #{tpu_custom_call.1} parent=0
    #allocation3 [shape = 'u8[8192]{0}', space=vmem, size = 0x2000, scoped, tag = 'input window, operand 0, single buffered']
    #allocation4 [shape = 's32[1]{0}', space=sflag, size = 0x4, scoped, tag = 'scoped memory for tpu_custom_call.1']
    %6 = vsyncpa [#allocation4], 0
    // Predicated region
    $region2: #{tpu_custom_call.1} parent=1 // pred_check
      _
    $region3: #{tpu_custom_call.1} parent=1 // pred_check_branch
      %8 = sbr.rel (0) target = $region5
    $region4: #{tpu_custom_call.1} parent=1 // pred_region
      %s9 = sadd.s32 0, 0
      %p10 = scmp.lt.s32.totalorder %s9, 0
      %s11 = scalar_select %p10, %s9, 0
      %s13 = ssub.s32 256, 256
      %14 = vsyncadd [#allocation4], %s13
      %s15 = smul.addr %s11, 128
      %s16 = scalar_lea.hbm %s0, %s15
      %s17 = sshll.u32 [#allocation3], 4
      %s18 = int_to_ptr.vmem [resolvable:$true] %s17
      %23 = dma.hbm_to_vmem [thread:$0]  %s16, 256, %s18, [#allocation4], 128, 128, 8
    $region5: #{tpu_custom_call.1} parent=1 // pred_fallthru
      _
    // Predicated region
    $region6: #{tpu_custom_call.1} parent=1 // pred_check
      _
    $region7: #{tpu_custom_call.1} parent=1 // pred_check_branch
      %25 = sbr.rel (0) target = $region9
    $region8: #{tpu_custom_call.1} parent=1 // pred_region
      %26 = dma.done [#allocation4], 256
    $region9: #{tpu_custom_call.1} parent=1 // pred_fallthru
      _
    %s27 = sadd.s32 0, 0
    %p28 = scmp.lt.s32.totalorder %s27, 0
    %s29 = scalar_select %p28, %s27, 0
    %p30 = scmp.eq.s32.totalorder 0, 0
    // Predicated region
    $region10: #{tpu_custom_call.1} parent=1 // pred_check
      %p31 = pneg %p30
    $region11: #{tpu_custom_call.1} parent=1 // pred_check_branch
      %33 = sbr.rel (%p31) target = $region13
    $region12: #{tpu_custom_call.1} parent=1 // pred_region
      %34 = vst [vmem:[#allocation2] sm:$0x3] 0.0
    $region13: #{tpu_custom_call.1} parent=1 // pred_fallthru
      _
    %v35 = vld [vmem:[#allocation3] sm:$0xff]
    %v36 = vld [vmem:[#allocation3 + $0x8] sm:$0xff]
    %v37 = vand.u32 2147483647, %v35
    %v38 = vand.u32 2147483647, %v36
    %v39 = vld [vmem:[#allocation2] sm:$0x3]
    %v40 = vrot.slane %v37, 4
    %v41 = vadd.f32 %v37, %v40
    %v42 = vrot.slane %v41, 2
    %v43 = vadd.f32 %v41, %v42
    %v44 = vrot.slane %v43, 1
    %v45 = vadd.f32 %v43, %v44
    %v46 = vrot.slane %v38, 4
    %v47 = vadd.f32 %v38, %v46
    %v48 = vrot.slane %v47, 2
    %v49 = vadd.f32 %v47, %v48
    %v50 = vrot.slane %v49, 1
    %v51 = vadd.f32 %v49, %v50
    %vm54 = vcmask 1041409
    %v55 = vsel %vm54, %v51, %v45
    %v57 = vadd.f32 %v39, %v55
    %58 = vst [vmem:[#allocation2] sm:$0x3] %v57
    // Predicated region
    $region14: #{tpu_custom_call.1} parent=1 // pred_check
      %p59 = pneg %p30
    $region15: #{tpu_custom_call.1} parent=1 // pred_check_branch
      %61 = sbr.rel (%p59) target = $region17
    $region16: #{tpu_custom_call.1} parent=1 // pred_region
      %v62 = vld [vmem:[#allocation2] sm:$0x3]
      %vm63 = vcmask 1041408
      %v64 = vsel %vm63, %v62, 0.0
      %65 = vadd.xlane.f32.xlu0 %v64
      %v66 = vpop.xlane.xlu0 %65
      %v67 = vmul.f32 %v66, 0.0009765625
      %vm68 = vcmask 1024
      %69 = vst.msk [vmem:[%s1] sm:$0x3] %vm68, %v67
    $region17: #{tpu_custom_call.1} parent=1 // pred_fallthru
      _
    // Predicated region
    $region18: #{tpu_custom_call.1} parent=1 // pred_check
      _
    $region19: #{tpu_custom_call.1} parent=1 // pred_check_branch
      %71 = sbr.rel (0) target = $region21
    $region20: #{tpu_custom_call.1} parent=1 // pred_region
      _
    $region21: #{tpu_custom_call.1} parent=1 // pred_fallthru
      _
    // Predicated region
    $region22: #{tpu_custom_call.1} parent=1 // pred_check
      _
    $region23: #{tpu_custom_call.1} parent=1 // pred_check_branch
      %73 = sbr.rel (0) target = $region25
    $region24: #{tpu_custom_call.1} parent=1 // pred_region
      _
    $region25: #{tpu_custom_call.1} parent=1 // pred_fallthru
      _
    %74 = vsyncpa [#allocation4], 1

</llo_original>
